<compile_context>
chip_gen: v7x
topology: tpu7x:2x2x1
jax: 0.10.0
libtpu: 0.0.40
codegen_flags: <defaults>
</compile_context>

<pallas_src>
import jax
import jax.numpy as jnp
from jax import lax
from jax.experimental import pallas as pl
from jax.experimental.pallas import tpu as pltpu

_LANES = 128
_EPS = 1e-9
_DEFAULT_ITERS = 8            # flattened Newton/Jacobi sweeps (upstream info moves 1 node / iter)
_TARGET_ELEMS_PER_STEP = 1024  # per-grid-step element block (amortizes ~0.35us step overhead)

# input slab indices: per-node fields first, then per-element scalars
(_I_AOLD, _I_HOLD, _I_W0, _I_INVW0,
 _I_RAIN, _I_UPQ, _I_DT, _I_INVDT,
 _I_FCB, _I_GAC, _I_SSSUM, _I_INVSS,
 _I_QLP, _I_R, _I_ALPHA, _I_WPC) = range(16)
_N_IN = 16

(_O_AREA, _O_DEPTH, _O_Q, _O_FRATE, _O_FDEPTH) = range(5)
_N_OUT = 5


def _round_up(x, m):
    return ((x + m - 1) // m) * m


def _make_kernel(n_pack: int, n_iters: int):
    """Kernel factory: n_pack = lanes per element segment (power of two)."""
    c53 = 5.0 / 3.0
    c23 = 2.0 / 3.0

    def kernel(inp_ref, out_ref):
        # ---- per-node fields (rows, 128), nodes lane-packed ----
        a_old = inp_ref[_I_AOLD, :, :]
        h_old = inp_ref[_I_HOLD, :, :]
        w0 = inp_ref[_I_W0, :, :]
        inv_w0 = inp_ref[_I_INVW0, :, :]
        # ---- per-element scalars, pre-broadcast across each lane segment ----
        rain = inp_ref[_I_RAIN, :, :]
        up_q = inp_ref[_I_UPQ, :, :]
        dt = inp_ref[_I_DT, :, :]
        inv_dt = inp_ref[_I_INVDT, :, :]
        f_cap_base = inp_ref[_I_FCB, :, :]
        ga_coef = inp_ref[_I_GAC, :, :]
        ss_sum = inp_ref[_I_SSSUM, :, :]
        inv_ss = inp_ref[_I_INVSS, :, :]
        q_lat_plane = inp_ref[_I_QLP, :, :]
        r = inp_ref[_I_R, :, :]
        alpha = inp_ref[_I_ALPHA, :, :]
        wp_coef = inp_ref[_I_WPC, :, :]

        lane_i = lax.broadcasted_iota(jnp.int32, a_old.shape, 1)
        seg_start = (lane_i & (n_pack - 1)) == 0        # first node of each element segment
        is_trap = ss_sum > 1e-7

        # ---------- Green-Ampt style infiltration ----------
        # f_cap = Ks*(1 + (G + h)*dtheta/F) ; Ks + Ks*dtheta/F*G precombined on host.
        f_cap = f_cap_base + ga_coef * h_old
        supply = rain + h_old * inv_dt
        infil_rate = jnp.maximum(jnp.minimum(f_cap, supply), 0.0)
        infil_depth = infil_rate * dt

        # ---------- lateral inflow per unit length ----------
        top_w = w0 + ss_sum * h_old
        net_rain = jnp.maximum(rain - infil_rate, 0.0)
        q_lat = net_rain * top_w + q_lat_plane

        # ---------- implicit kinematic wave (backward Euler, upwind) ----------
        # hoisted loop invariants (nothing below re-broadcasts inside the loop)
        rhs_base = a_old + dt * q_lat
        r53 = r * c53
        w0sq = w0 * w0
        two_ss = 2.0 * ss_sum

        def q_of_a(a):
            # trapezoid depth + wetted perimeter, Manning Q via fused exp/log
            disc = jnp.sqrt(jnp.maximum(w0sq + two_ss * a, 0.0))
            h = jnp.where(is_trap, (disc - w0) * inv_ss, a * inv_w0)
            wp = w0 + h * wp_coef
            q = alpha * jnp.exp(c53 * jnp.log(jnp.maximum(a, _EPS))
                                - c23 * jnp.log(jnp.maximum(wp, _EPS)))
            return jnp.where(a > _EPS, q, 0.0)

        a0 = jnp.maximum(a_old, 0.0)
        q0 = q_of_a(a0)

        def body(_, carry):
            a_cur, q_cur = carry
            # upwind coupling: node i sees Q at node i-1 of the SAME element;
            # first node of every segment sees the element's upstream inflow.
            q_up = jnp.where(seg_start, up_q, pltpu.roll(q_cur, shift=1, axis=1))
            # Newton on f(A) = A + r*Q(A) - (A_old + dt*q_lat + r*q_up)
            # TODO(synk): dQ/dA ~ (5/3) Q / A ignores the dWP/dA term of the exact solver.
            f_val = (a_cur - rhs_base) + r * (q_cur - q_up)
            df = 1.0 + r53 * q_cur * pl.reciprocal(jnp.maximum(a_cur, _EPS), approx=True)
            a_new = jnp.maximum(a_cur - f_val * pl.reciprocal(df, approx=True), 0.0)
            return a_new, q_of_a(a_new)

        a_cur, q_cur = lax.fori_loop(0, n_iters, body, (a0, q0), unroll=True)

        # final depth from the converged area, computed once in the epilogue
        disc = jnp.sqrt(jnp.maximum(w0sq + two_ss * a_cur, 0.0))
        h_next = jnp.where(is_trap, (disc - w0) * inv_ss, a_cur * inv_w0)

        out_ref[_O_AREA, :, :] = a_cur
        out_ref[_O_DEPTH, :, :] = h_next
        out_ref[_O_Q, :, :] = q_cur
        out_ref[_O_FRATE, :, :] = infil_rate
        out_ref[_O_FDEPTH, :, :] = infil_depth

    return kernel


def channel_elements_step(props, soil, state, rain_rate, upstream_q, plane_lateral_q, dt_s,
                          *, n_iters=_DEFAULT_ITERS, target_elems=_TARGET_ELEMS_PER_STEP):
    """Batched ChannelElement_im.forward for B independent channel elements.

    Returns ((outflow_q[B], infil_rate_nodes[B,N], infil_depth_nodes[B,N]), new_state).
    """
    w0_nodes = jnp.asarray(props["W0_nodes"], jnp.float32)
    b, n = w0_nodes.shape
    assert n <= _LANES, "node count must fit in one lane register"

    # lane packing: n_pack lanes per element, P elements per 128-lane row
    n_pack = int(pl.next_power_of_2(n))
    p_per_row = _LANES // n_pack
    rows_needed = -(-b // p_per_row)
    b_lane_pad = rows_needed * p_per_row

    row_block = min(_round_up(max(1, target_elems // p_per_row), 8), 512)
    row_block = min(row_block, _round_up(rows_needed, 8))
    rows_pad = _round_up(rows_needed, row_block)

    def bvec(x):
        return jnp.broadcast_to(jnp.asarray(x, jnp.float32), (b,))

    # ---------- host-side exact precomputation of per-element scalars ----------
    rain = bvec(rain_rate); up_q = bvec(upstream_q)
    plane_q = bvec(plane_lateral_q); dt = bvec(dt_s)
    ks = bvec(soil["Ks"]); g_cap = bvec(soil["G"])
    theta_s = bvec(soil["theta_s"]); soil_d = bvec(soil["soil_depth"])
    ss1 = bvec(props["SS1"]); ss2 = bvec(props["SS2"])
    man = bvec(props["MAN"]); sl = bvec(props["SL"]); length = bvec(props["LEN"])
    theta_cur = bvec(state["theta_current"]); f_cum = bvec(state["F_cumulative"])
    dry_cum = bvec(state["drying_cumulative"]); t_el = bvec(state["t_elapsed"])

    dtheta = jnp.maximum(theta_s - theta_cur, 0.0)
    ga_coef = ks * dtheta / jnp.maximum(f_cum, 1e-9)          # exact host division
    f_cap_base = ks + ga_coef * g_cap
    inv_dt = 1.0 / dt
    ss_sum = ss1 + ss2
    inv_ss = 1.0 / jnp.maximum(ss_sum, 1e-7)
    wp_coef = jnp.sqrt(1.0 + ss1 * ss1) + jnp.sqrt(1.0 + ss2 * ss2)
    alpha = jnp.sqrt(jnp.maximum(sl, 0.0)) / man
    q_lat_plane = jnp.where(length > 0.0, plane_q / jnp.maximum(length, _EPS), 0.0)
    dx = length / float(max(n - 1, 1))
    r = dt / jnp.maximum(dx, _EPS)                            # dt / dx

    inv_w0_nodes = 1.0 / jnp.maximum(w0_nodes, _EPS)

    # ---------- lane packing helpers ----------
    def pack_nodes(x, pad_val):
        x = jnp.asarray(x, jnp.float32)
        x = jnp.pad(x, ((0, b_lane_pad - b), (0, n_pack - n)), constant_values=pad_val)
        x = x.reshape(rows_needed, p_per_row * n_pack)
        return jnp.pad(x, ((0, rows_pad - rows_needed), (0, 0)), constant_values=pad_val)

    def pack_scal(x, pad_val=0.0):
        x = jnp.broadcast_to(jnp.asarray(x, jnp.float32)[:, None], (b, n_pack))
        x = jnp.pad(x, ((0, b_lane_pad - b), (0, 0)), constant_values=pad_val)
        x = x.reshape(rows_needed, p_per_row * n_pack)
        return jnp.pad(x, ((0, rows_pad - rows_needed), (0, 0)), constant_values=pad_val)

    inp = jnp.stack([
        pack_nodes(state["area"], 0.0), pack_nodes(state["depth"], 0.0),
        pack_nodes(w0_nodes, 1.0), pack_nodes(inv_w0_nodes, 1.0),
        pack_scal(rain), pack_scal(up_q), pack_scal(dt), pack_scal(inv_dt),
        pack_scal(f_cap_base), pack_scal(ga_coef), pack_scal(ss_sum), pack_scal(inv_ss),
        pack_scal(q_lat_plane), pack_scal(r), pack_scal(alpha), pack_scal(wp_coef),
    ], axis=0)                                                # (16, rows_pad, 128)

    block_bytes = (_N_IN + _N_OUT) * row_block * _LANES * 4
    out = pl.pallas_call(
        _make_kernel(n_pack, n_iters),
        out_shape=jax.ShapeDtypeStruct((_N_OUT, rows_pad, _LANES), jnp.float32),
        grid=(rows_pad // row_block,),
        in_specs=[pl.BlockSpec((_N_IN, row_block, _LANES), lambda i: (0, i, 0))],
        out_specs=pl.BlockSpec((_N_OUT, row_block, _LANES), lambda i: (0, i, 0)),
        compiler_params=pltpu.CompilerParams(
            dimension_semantics=("parallel",),
            vmem_limit_bytes=int(max(32 * 1024 * 1024, 4 * block_bytes)),
        ),
    )(inp)

    # unpack lane-packed outputs back to (B, N)
    out_el = out.reshape(_N_OUT, rows_pad * p_per_row, n_pack)[:, :b, :n]
    area_n = out_el[_O_AREA]
    depth_n = out_el[_O_DEPTH]
    q_n = out_el[_O_Q]
    infil_rate_nodes = out_el[_O_FRATE]
    infil_depth_nodes = out_el[_O_FDEPTH]

    # ---------- per-element scalar state update (exact arithmetic, carried state) ----------
    d_f = jnp.sum(infil_depth_nodes, axis=1) / float(n)
    f_new = f_cum + d_f
    theta_new = jnp.minimum(theta_s, theta_cur + d_f / jnp.maximum(soil_d, _EPS))
    dry_new = dry_cum  # TODO(synk): drying/redistribution branch of infiltration_step_intermediate_ not specified.
    t_new = t_el + dt

    new_state = {
        "area": area_n,
        "depth": depth_n,
        "discharge": q_n,
        "theta_current": theta_new,
        "F_cumulative": f_new,
        "drying_cumulative": dry_new,
        "t_elapsed": t_new,
    }
    outflow_q = q_n[:, -1]
    return (outflow_q, infil_rate_nodes, infil_depth_nodes), new_state


if __name__ == "__main__":
    B, N = 8, 16   # 8 channel elements x 16 nodes -> one lane-packed row
    key = jax.random.PRNGKey(0)
    k1, k2, k3 = jax.random.split(key, 3)

    props = {
        "W0_nodes": jnp.tile(jnp.linspace(1.0, 2.0, N, dtype=jnp.float32)[None, :], (B, 1)),
        "SS1": jnp.full((B,), 1.0, jnp.float32),
        "SS2": jnp.full((B,), 1.5, jnp.float32),
        "MAN": jnp.full((B,), 0.035, jnp.float32),
        "SL": jnp.full((B,), 0.01, jnp.float32),
        "LEN": jnp.full((B,), 200.0, jnp.float32),
    }
    soil = {
        "Ks": jnp.full((B,), 1e-6, jnp.float32),
        "G": jnp.full((B,), 0.11, jnp.float32),
        "theta_s": jnp.full((B,), 0.453, jnp.float32),
        "soil_depth": jnp.full((B,), 0.5, jnp.float32),
    }
    # buffers initialized exactly as the module does (zeros / theta_init)
    state = {
        "area": jnp.zeros((B, N), jnp.float32),
        "depth": jnp.zeros((B, N), jnp.float32),
        "discharge": jnp.zeros((B, N), jnp.float32),
        "theta_current": jnp.full((B,), 0.15, jnp.float32),
        "F_cumulative": jnp.zeros((B,), jnp.float32),
        "drying_cumulative": jnp.zeros((B,), jnp.float32),
        "t_elapsed": jnp.zeros((B,), jnp.float32),
    }

    rain_rate = jax.random.uniform(k1, (B,), jnp.float32, 5e-6, 2e-5)   # m/s
    upstream_q = jax.random.uniform(k2, (B,), jnp.float32, 0.1, 1.0)    # m^3/s
    plane_lateral_q = jax.random.uniform(k3, (B,), jnp.float32, 0.01, 0.1)
    dt_s = jnp.full((B,), 30.0, jnp.float32)

    (outflow_q, infil_rate_nodes, infil_depth_nodes), new_state = channel_elements_step(
        props, soil, state, rain_rate, upstream_q, plane_lateral_q, dt_s)

    jax.block_until_ready((outflow_q, infil_rate_nodes, infil_depth_nodes, new_state))

    ok = (jnp.all(jnp.isfinite(outflow_q))
          & jnp.all(jnp.isfinite(infil_rate_nodes))
          & jnp.all(jnp.isfinite(infil_depth_nodes))
          & jnp.all(jnp.isfinite(new_state["area"]))
          & jnp.all(jnp.isfinite(new_state["depth"]))
          & jnp.all(jnp.isfinite(new_state["discharge"]))
          & jnp.all(jnp.isfinite(new_state["theta_current"]))
          & jnp.all(jnp.isfinite(new_state["F_cumulative"])))
    assert bool(ok)
    print("KERNEL_OK")
</pallas_src>

<mosaic_0001>
module attributes {stable_mosaic.version = 11 : i64} {
  func.func @kernel(%arg0: i32, %arg1: memref<16x8x128xf32, #tpu.memory_space<vmem>>, %arg2: memref<5x8x128xf32, #tpu.memory_space<vmem>>) attributes {dimension_semantics = [#tpu.dimension_semantics<parallel>], iteration_bounds = array<i64: 1>, scalar_prefetch = 0 : i64, scratch_operands = 0 : i64, tpu.core_type = #tpu.core_type<tc>, window_params = [{transform_indices = @transform_0, window_bounds = array<i64: 16, 8, 128>}, {transform_indices = @transform_1, window_bounds = array<i64: 5, 8, 128>}]} {
    %c0 = arith.constant 0 : index
    %c0_0 = arith.constant 0 : index
    %c0_1 = arith.constant 0 : index
    %0 = vector.load %arg1[%c0, %c0_0, %c0_1] : memref<16x8x128xf32, #tpu.memory_space<vmem>>, vector<1x8x128xf32>
    %1 = vector.shape_cast %0 : vector<1x8x128xf32> to vector<8x128xf32>
    %c1 = arith.constant 1 : index
    %c0_2 = arith.constant 0 : index
    %c0_3 = arith.constant 0 : index
    %2 = vector.load %arg1[%c1, %c0_2, %c0_3] : memref<16x8x128xf32, #tpu.memory_space<vmem>>, vector<1x8x128xf32>
    %3 = vector.shape_cast %2 : vector<1x8x128xf32> to vector<8x128xf32>
    %c2 = arith.constant 2 : index
    %c0_4 = arith.constant 0 : index
    %c0_5 = arith.constant 0 : index
    %4 = vector.load %arg1[%c2, %c0_4, %c0_5] : memref<16x8x128xf32, #tpu.memory_space<vmem>>, vector<1x8x128xf32>
    %5 = vector.shape_cast %4 : vector<1x8x128xf32> to vector<8x128xf32>
    %c3 = arith.constant 3 : index
    %c0_6 = arith.constant 0 : index
    %c0_7 = arith.constant 0 : index
    %6 = vector.load %arg1[%c3, %c0_6, %c0_7] : memref<16x8x128xf32, #tpu.memory_space<vmem>>, vector<1x8x128xf32>
    %7 = vector.shape_cast %6 : vector<1x8x128xf32> to vector<8x128xf32>
    %c4 = arith.constant 4 : index
    %c0_8 = arith.constant 0 : index
    %c0_9 = arith.constant 0 : index
    %8 = vector.load %arg1[%c4, %c0_8, %c0_9] : memref<16x8x128xf32, #tpu.memory_space<vmem>>, vector<1x8x128xf32>
    %9 = vector.shape_cast %8 : vector<1x8x128xf32> to vector<8x128xf32>
    %c5 = arith.constant 5 : index
    %c0_10 = arith.constant 0 : index
    %c0_11 = arith.constant 0 : index
    %10 = vector.load %arg1[%c5, %c0_10, %c0_11] : memref<16x8x128xf32, #tpu.memory_space<vmem>>, vector<1x8x128xf32>
    %11 = vector.shape_cast %10 : vector<1x8x128xf32> to vector<8x128xf32>
    %c6 = arith.constant 6 : index
    %c0_12 = arith.constant 0 : index
    %c0_13 = arith.constant 0 : index
    %12 = vector.load %arg1[%c6, %c0_12, %c0_13] : memref<16x8x128xf32, #tpu.memory_space<vmem>>, vector<1x8x128xf32>
    %13 = vector.shape_cast %12 : vector<1x8x128xf32> to vector<8x128xf32>
    %c7 = arith.constant 7 : index
    %c0_14 = arith.constant 0 : index
    %c0_15 = arith.constant 0 : index
    %14 = vector.load %arg1[%c7, %c0_14, %c0_15] : memref<16x8x128xf32, #tpu.memory_space<vmem>>, vector<1x8x128xf32>
    %15 = vector.shape_cast %14 : vector<1x8x128xf32> to vector<8x128xf32>
    %c8 = arith.constant 8 : index
    %c0_16 = arith.constant 0 : index
    %c0_17 = arith.constant 0 : index
    %16 = vector.load %arg1[%c8, %c0_16, %c0_17] : memref<16x8x128xf32, #tpu.memory_space<vmem>>, vector<1x8x128xf32>
    %17 = vector.shape_cast %16 : vector<1x8x128xf32> to vector<8x128xf32>
    %c9 = arith.constant 9 : index
    %c0_18 = arith.constant 0 : index
    %c0_19 = arith.constant 0 : index
    %18 = vector.load %arg1[%c9, %c0_18, %c0_19] : memref<16x8x128xf32, #tpu.memory_space<vmem>>, vector<1x8x128xf32>
    %19 = vector.shape_cast %18 : vector<1x8x128xf32> to vector<8x128xf32>
    %c10 = arith.constant 10 : index
    %c0_20 = arith.constant 0 : index
    %c0_21 = arith.constant 0 : index
    %20 = vector.load %arg1[%c10, %c0_20, %c0_21] : memref<16x8x128xf32, #tpu.memory_space<vmem>>, vector<1x8x128xf32>
    %21 = vector.shape_cast %20 : vector<1x8x128xf32> to vector<8x128xf32>
    %c11 = arith.constant 11 : index
    %c0_22 = arith.constant 0 : index
    %c0_23 = arith.constant 0 : index
    %22 = vector.load %arg1[%c11, %c0_22, %c0_23] : memref<16x8x128xf32, #tpu.memory_space<vmem>>, vector<1x8x128xf32>
    %23 = vector.shape_cast %22 : vector<1x8x128xf32> to vector<8x128xf32>
    %c12 = arith.constant 12 : index
    %c0_24 = arith.constant 0 : index
    %c0_25 = arith.constant 0 : index
    %24 = vector.load %arg1[%c12, %c0_24, %c0_25] : memref<16x8x128xf32, #tpu.memory_space<vmem>>, vector<1x8x128xf32>
    %25 = vector.shape_cast %24 : vector<1x8x128xf32> to vector<8x128xf32>
    %c13 = arith.constant 13 : index
    %c0_26 = arith.constant 0 : index
    %c0_27 = arith.constant 0 : index
    %26 = vector.load %arg1[%c13, %c0_26, %c0_27] : memref<16x8x128xf32, #tpu.memory_space<vmem>>, vector<1x8x128xf32>
    %27 = vector.shape_cast %26 : vector<1x8x128xf32> to vector<8x128xf32>
    %c14 = arith.constant 14 : index
    %c0_28 = arith.constant 0 : index
    %c0_29 = arith.constant 0 : index
    %28 = vector.load %arg1[%c14, %c0_28, %c0_29] : memref<16x8x128xf32, #tpu.memory_space<vmem>>, vector<1x8x128xf32>
    %29 = vector.shape_cast %28 : vector<1x8x128xf32> to vector<8x128xf32>
    %c15 = arith.constant 15 : index
    %c0_30 = arith.constant 0 : index
    %c0_31 = arith.constant 0 : index
    %30 = vector.load %arg1[%c15, %c0_30, %c0_31] : memref<16x8x128xf32, #tpu.memory_space<vmem>>, vector<1x8x128xf32>
    %31 = vector.shape_cast %30 : vector<1x8x128xf32> to vector<8x128xf32>
    %32 = tpu.iota {dimensions = array<i32: 1>} : vector<8x128xi32>
    %c15_i32 = arith.constant 15 : i32
    %33 = vector.broadcast %c15_i32 : i32 to vector<8x128xi32>
    %34 = arith.andi %32, %33 : vector<8x128xi32>
    %c0_i32 = arith.constant 0 : i32
    %35 = vector.broadcast %c0_i32 : i32 to vector<8x128xi32>
    %36 = arith.cmpi eq, %34, %35 : vector<8x128xi32>
    %cst = arith.constant 1.000000e-07 : f32
    %37 = vector.broadcast %cst : f32 to vector<8x128xf32>
    %38 = arith.cmpf ogt, %21, %37 : vector<8x128xf32>
    %39 = arith.mulf %19, %3 : vector<8x128xf32>
    %40 = arith.addf %17, %39 : vector<8x128xf32>
    %41 = arith.mulf %3, %15 : vector<8x128xf32>
    %42 = arith.addf %9, %41 : vector<8x128xf32>
    %43 = arith.minimumf %40, %42 : vector<8x128xf32>
    %cst_32 = arith.constant 0.000000e+00 : f32
    %44 = vector.broadcast %cst_32 : f32 to vector<8x128xf32>
    %45 = arith.maximumf %43, %44 : vector<8x128xf32>
    %46 = arith.mulf %45, %13 : vector<8x128xf32>
    %47 = arith.mulf %21, %3 : vector<8x128xf32>
    %48 = arith.addf %5, %47 : vector<8x128xf32>
    %49 = arith.subf %9, %45 : vector<8x128xf32>
    %cst_33 = arith.constant 0.000000e+00 : f32
    %50 = vector.broadcast %cst_33 : f32 to vector<8x128xf32>
    %51 = arith.maximumf %49, %50 : vector<8x128xf32>
    %52 = arith.mulf %51, %48 : vector<8x128xf32>
    %53 = arith.addf %52, %25 : vector<8x128xf32>
    %54 = arith.mulf %13, %53 : vector<8x128xf32>
    %55 = arith.addf %1, %54 : vector<8x128xf32>
    %cst_34 = arith.constant 1.66666663 : f32
    %56 = vector.broadcast %cst_34 : f32 to vector<8x128xf32>
    %57 = arith.mulf %27, %56 : vector<8x128xf32>
    %58 = arith.mulf %5, %5 : vector<8x128xf32>
    %cst_35 = arith.constant 2.000000e+00 : f32
    %59 = vector.broadcast %cst_35 : f32 to vector<8x128xf32>
    %60 = arith.mulf %59, %21 : vector<8x128xf32>
    %cst_36 = arith.constant 0.000000e+00 : f32
    %61 = vector.broadcast %cst_36 : f32 to vector<8x128xf32>
    %62 = arith.maximumf %1, %61 : vector<8x128xf32>
    %63 = arith.mulf %60, %62 : vector<8x128xf32>
    %64 = arith.addf %58, %63 : vector<8x128xf32>
    %cst_37 = arith.constant 0.000000e+00 : f32
    %65 = vector.broadcast %cst_37 : f32 to vector<8x128xf32>
    %66 = arith.maximumf %64, %65 : vector<8x128xf32>
    %67 = math.sqrt %66 : vector<8x128xf32>
    %68 = arith.subf %67, %5 : vector<8x128xf32>
    %69 = arith.mulf %68, %23 : vector<8x128xf32>
    %70 = arith.mulf %62, %7 : vector<8x128xf32>
    %71 = arith.select %38, %69, %70 : vector<8x128xi1>, vector<8x128xf32>
    %72 = arith.mulf %71, %31 : vector<8x128xf32>
    %73 = arith.addf %5, %72 : vector<8x128xf32>
    %cst_38 = arith.constant 9.99999971E-10 : f32
    %74 = vector.broadcast %cst_38 : f32 to vector<8x128xf32>
    %75 = arith.maximumf %62, %74 : vector<8x128xf32>
    %76 = math.log %75 : vector<8x128xf32>
    %cst_39 = arith.constant 1.66666663 : f32
    %77 = vector.broadcast %cst_39 : f32 to vector<8x128xf32>
    %78 = arith.mulf %77, %76 : vector<8x128xf32>
    %cst_40 = arith.constant 9.99999971E-10 : f32
    %79 = vector.broadcast %cst_40 : f32 to vector<8x128xf32>
    %80 = arith.maximumf %73, %79 : vector<8x128xf32>
    %81 = math.log %80 : vector<8x128xf32>
    %cst_41 = arith.constant 0.666666686 : f32
    %82 = vector.broadcast %cst_41 : f32 to vector<8x128xf32>
    %83 = arith.mulf %82, %81 : vector<8x128xf32>
    %84 = arith.subf %78, %83 : vector<8x128xf32>
    %85 = math.exp %84 : vector<8x128xf32>
    %86 = arith.mulf %29, %85 : vector<8x128xf32>
    %cst_42 = arith.constant 9.99999971E-10 : f32
    %87 = vector.broadcast %cst_42 : f32 to vector<8x128xf32>
    %88 = arith.cmpf ogt, %62, %87 : vector<8x128xf32>
    %cst_43 = arith.constant 0.000000e+00 : f32
    %89 = vector.broadcast %cst_43 : f32 to vector<8x128xf32>
    %90 = arith.select %88, %86, %89 : vector<8x128xi1>, vector<8x128xf32>
    %c0_i32_44 = arith.constant 0 : i32
    %c1_i32 = arith.constant 1 : i32
    %91 = tpu.dynamic_rotate %90 by %c1_i32 dim 1 : vector<8x128xf32>, i32 -> vector<8x128xf32>
    %92 = arith.select %36, %11, %91 : vector<8x128xi1>, vector<8x128xf32>
    %93 = arith.subf %62, %55 : vector<8x128xf32>
    %94 = arith.subf %90, %92 : vector<8x128xf32>
    %95 = arith.mulf %27, %94 : vector<8x128xf32>
    %96 = arith.addf %93, %95 : vector<8x128xf32>
    %97 = arith.mulf %57, %90 : vector<8x128xf32>
    %cst_45 = arith.constant 9.99999971E-10 : f32
    %98 = vector.broadcast %cst_45 : f32 to vector<8x128xf32>
    %99 = arith.maximumf %62, %98 : vector<8x128xf32>
    %100 = tpu.reciprocal %99 {approx = true} : vector<8x128xf32> -> vector<8x128xf32>
    %101 = arith.mulf %97, %100 : vector<8x128xf32>
    %cst_46 = arith.constant 1.000000e+00 : f32
    %102 = vector.broadcast %cst_46 : f32 to vector<8x128xf32>
    %103 = arith.addf %102, %101 : vector<8x128xf32>
    %104 = tpu.reciprocal %103 {approx = true} : vector<8x128xf32> -> vector<8x128xf32>
    %105 = arith.mulf %96, %104 : vector<8x128xf32>
    %106 = arith.subf %62, %105 : vector<8x128xf32>
    %cst_47 = arith.constant 0.000000e+00 : f32
    %107 = vector.broadcast %cst_47 : f32 to vector<8x128xf32>
    %108 = arith.maximumf %106, %107 : vector<8x128xf32>
    %109 = arith.mulf %60, %108 : vector<8x128xf32>
    %110 = arith.addf %58, %109 : vector<8x128xf32>
    %cst_48 = arith.constant 0.000000e+00 : f32
    %111 = vector.broadcast %cst_48 : f32 to vector<8x128xf32>
    %112 = arith.maximumf %110, %111 : vector<8x128xf32>
    %113 = math.sqrt %112 : vector<8x128xf32>
    %114 = arith.subf %113, %5 : vector<8x128xf32>
    %115 = arith.mulf %114, %23 : vector<8x128xf32>
    %116 = arith.mulf %108, %7 : vector<8x128xf32>
    %117 = arith.select %38, %115, %116 : vector<8x128xi1>, vector<8x128xf32>
    %118 = arith.mulf %117, %31 : vector<8x128xf32>
    %119 = arith.addf %5, %118 : vector<8x128xf32>
    %cst_49 = arith.constant 9.99999971E-10 : f32
    %120 = vector.broadcast %cst_49 : f32 to vector<8x128xf32>
    %121 = arith.maximumf %108, %120 : vector<8x128xf32>
    %122 = math.log %121 : vector<8x128xf32>
    %cst_50 = arith.constant 1.66666663 : f32
    %123 = vector.broadcast %cst_50 : f32 to vector<8x128xf32>
    %124 = arith.mulf %123, %122 : vector<8x128xf32>
    %cst_51 = arith.constant 9.99999971E-10 : f32
    %125 = vector.broadcast %cst_51 : f32 to vector<8x128xf32>
    %126 = arith.maximumf %119, %125 : vector<8x128xf32>
    %127 = math.log %126 : vector<8x128xf32>
    %cst_52 = arith.constant 0.666666686 : f32
    %128 = vector.broadcast %cst_52 : f32 to vector<8x128xf32>
    %129 = arith.mulf %128, %127 : vector<8x128xf32>
    %130 = arith.subf %124, %129 : vector<8x128xf32>
    %131 = math.exp %130 : vector<8x128xf32>
    %132 = arith.mulf %29, %131 : vector<8x128xf32>
    %cst_53 = arith.constant 9.99999971E-10 : f32
    %133 = vector.broadcast %cst_53 : f32 to vector<8x128xf32>
    %134 = arith.cmpf ogt, %108, %133 : vector<8x128xf32>
    %cst_54 = arith.constant 0.000000e+00 : f32
    %135 = vector.broadcast %cst_54 : f32 to vector<8x128xf32>
    %136 = arith.select %134, %132, %135 : vector<8x128xi1>, vector<8x128xf32>
    %c1_i32_55 = arith.constant 1 : i32
    %c1_i32_56 = arith.constant 1 : i32
    %137 = tpu.dynamic_rotate %136 by %c1_i32_56 dim 1 : vector<8x128xf32>, i32 -> vector<8x128xf32>
    %138 = arith.select %36, %11, %137 : vector<8x128xi1>, vector<8x128xf32>
    %139 = arith.subf %108, %55 : vector<8x128xf32>
    %140 = arith.subf %136, %138 : vector<8x128xf32>
    %141 = arith.mulf %27, %140 : vector<8x128xf32>
    %142 = arith.addf %139, %141 : vector<8x128xf32>
    %143 = arith.mulf %57, %136 : vector<8x128xf32>
    %cst_57 = arith.constant 9.99999971E-10 : f32
    %144 = vector.broadcast %cst_57 : f32 to vector<8x128xf32>
    %145 = arith.maximumf %108, %144 : vector<8x128xf32>
    %146 = tpu.reciprocal %145 {approx = true} : vector<8x128xf32> -> vector<8x128xf32>
    %147 = arith.mulf %143, %146 : vector<8x128xf32>
    %cst_58 = arith.constant 1.000000e+00 : f32
    %148 = vector.broadcast %cst_58 : f32 to vector<8x128xf32>
    %149 = arith.addf %148, %147 : vector<8x128xf32>
    %150 = tpu.reciprocal %149 {approx = true} : vector<8x128xf32> -> vector<8x128xf32>
    %151 = arith.mulf %142, %150 : vector<8x128xf32>
    %152 = arith.subf %108, %151 : vector<8x128xf32>
    %cst_59 = arith.constant 0.000000e+00 : f32
    %153 = vector.broadcast %cst_59 : f32 to vector<8x128xf32>
    %154 = arith.maximumf %152, %153 : vector<8x128xf32>
    %155 = arith.mulf %60, %154 : vector<8x128xf32>
    %156 = arith.addf %58, %155 : vector<8x128xf32>
    %cst_60 = arith.constant 0.000000e+00 : f32
    %157 = vector.broadcast %cst_60 : f32 to vector<8x128xf32>
    %158 = arith.maximumf %156, %157 : vector<8x128xf32>
    %159 = math.sqrt %158 : vector<8x128xf32>
    %160 = arith.subf %159, %5 : vector<8x128xf32>
    %161 = arith.mulf %160, %23 : vector<8x128xf32>
    %162 = arith.mulf %154, %7 : vector<8x128xf32>
    %163 = arith.select %38, %161, %162 : vector<8x128xi1>, vector<8x128xf32>
    %164 = arith.mulf %163, %31 : vector<8x128xf32>
    %165 = arith.addf %5, %164 : vector<8x128xf32>
    %cst_61 = arith.constant 9.99999971E-10 : f32
    %166 = vector.broadcast %cst_61 : f32 to vector<8x128xf32>
    %167 = arith.maximumf %154, %166 : vector<8x128xf32>
    %168 = math.log %167 : vector<8x128xf32>
    %cst_62 = arith.constant 1.66666663 : f32
    %169 = vector.broadcast %cst_62 : f32 to vector<8x128xf32>
    %170 = arith.mulf %169, %168 : vector<8x128xf32>
    %cst_63 = arith.constant 9.99999971E-10 : f32
    %171 = vector.broadcast %cst_63 : f32 to vector<8x128xf32>
    %172 = arith.maximumf %165, %171 : vector<8x128xf32>
    %173 = math.log %172 : vector<8x128xf32>
    %cst_64 = arith.constant 0.666666686 : f32
    %174 = vector.broadcast %cst_64 : f32 to vector<8x128xf32>
    %175 = arith.mulf %174, %173 : vector<8x128xf32>
    %176 = arith.subf %170, %175 : vector<8x128xf32>
    %177 = math.exp %176 : vector<8x128xf32>
    %178 = arith.mulf %29, %177 : vector<8x128xf32>
    %cst_65 = arith.constant 9.99999971E-10 : f32
    %179 = vector.broadcast %cst_65 : f32 to vector<8x128xf32>
    %180 = arith.cmpf ogt, %154, %179 : vector<8x128xf32>
    %cst_66 = arith.constant 0.000000e+00 : f32
    %181 = vector.broadcast %cst_66 : f32 to vector<8x128xf32>
    %182 = arith.select %180, %178, %181 : vector<8x128xi1>, vector<8x128xf32>
    %c2_i32 = arith.constant 2 : i32
    %c1_i32_67 = arith.constant 1 : i32
    %183 = tpu.dynamic_rotate %182 by %c1_i32_67 dim 1 : vector<8x128xf32>, i32 -> vector<8x128xf32>
    %184 = arith.select %36, %11, %183 : vector<8x128xi1>, vector<8x128xf32>
    %185 = arith.subf %154, %55 : vector<8x128xf32>
    %186 = arith.subf %182, %184 : vector<8x128xf32>
    %187 = arith.mulf %27, %186 : vector<8x128xf32>
    %188 = arith.addf %185, %187 : vector<8x128xf32>
    %189 = arith.mulf %57, %182 : vector<8x128xf32>
    %cst_68 = arith.constant 9.99999971E-10 : f32
    %190 = vector.broadcast %cst_68 : f32 to vector<8x128xf32>
    %191 = arith.maximumf %154, %190 : vector<8x128xf32>
    %192 = tpu.reciprocal %191 {approx = true} : vector<8x128xf32> -> vector<8x128xf32>
    %193 = arith.mulf %189, %192 : vector<8x128xf32>
    %cst_69 = arith.constant 1.000000e+00 : f32
    %194 = vector.broadcast %cst_69 : f32 to vector<8x128xf32>
    %195 = arith.addf %194, %193 : vector<8x128xf32>
    %196 = tpu.reciprocal %195 {approx = true} : vector<8x128xf32> -> vector<8x128xf32>
    %197 = arith.mulf %188, %196 : vector<8x128xf32>
    %198 = arith.subf %154, %197 : vector<8x128xf32>
    %cst_70 = arith.constant 0.000000e+00 : f32
    %199 = vector.broadcast %cst_70 : f32 to vector<8x128xf32>
    %200 = arith.maximumf %198, %199 : vector<8x128xf32>
    %201 = arith.mulf %60, %200 : vector<8x128xf32>
    %202 = arith.addf %58, %201 : vector<8x128xf32>
    %cst_71 = arith.constant 0.000000e+00 : f32
    %203 = vector.broadcast %cst_71 : f32 to vector<8x128xf32>
    %204 = arith.maximumf %202, %203 : vector<8x128xf32>
    %205 = math.sqrt %204 : vector<8x128xf32>
    %206 = arith.subf %205, %5 : vector<8x128xf32>
    %207 = arith.mulf %206, %23 : vector<8x128xf32>
    %208 = arith.mulf %200, %7 : vector<8x128xf32>
    %209 = arith.select %38, %207, %208 : vector<8x128xi1>, vector<8x128xf32>
    %210 = arith.mulf %209, %31 : vector<8x128xf32>
    %211 = arith.addf %5, %210 : vector<8x128xf32>
    %cst_72 = arith.constant 9.99999971E-10 : f32
    %212 = vector.broadcast %cst_72 : f32 to vector<8x128xf32>
    %213 = arith.maximumf %200, %212 : vector<8x128xf32>
    %214 = math.log %213 : vector<8x128xf32>
    %cst_73 = arith.constant 1.66666663 : f32
    %215 = vector.broadcast %cst_73 : f32 to vector<8x128xf32>
    %216 = arith.mulf %215, %214 : vector<8x128xf32>
    %cst_74 = arith.constant 9.99999971E-10 : f32
    %217 = vector.broadcast %cst_74 : f32 to vector<8x128xf32>
    %218 = arith.maximumf %211, %217 : vector<8x128xf32>
    %219 = math.log %218 : vector<8x128xf32>
    %cst_75 = arith.constant 0.666666686 : f32
    %220 = vector.broadcast %cst_75 : f32 to vector<8x128xf32>
    %221 = arith.mulf %220, %219 : vector<8x128xf32>
    %222 = arith.subf %216, %221 : vector<8x128xf32>
    %223 = math.exp %222 : vector<8x128xf32>
    %224 = arith.mulf %29, %223 : vector<8x128xf32>
    %cst_76 = arith.constant 9.99999971E-10 : f32
    %225 = vector.broadcast %cst_76 : f32 to vector<8x128xf32>
    %226 = arith.cmpf ogt, %200, %225 : vector<8x128xf32>
    %cst_77 = arith.constant 0.000000e+00 : f32
    %227 = vector.broadcast %cst_77 : f32 to vector<8x128xf32>
    %228 = arith.select %226, %224, %227 : vector<8x128xi1>, vector<8x128xf32>
    %c3_i32 = arith.constant 3 : i32
    %c1_i32_78 = arith.constant 1 : i32
    %229 = tpu.dynamic_rotate %228 by %c1_i32_78 dim 1 : vector<8x128xf32>, i32 -> vector<8x128xf32>
    %230 = arith.select %36, %11, %229 : vector<8x128xi1>, vector<8x128xf32>
    %231 = arith.subf %200, %55 : vector<8x128xf32>
    %232 = arith.subf %228, %230 : vector<8x128xf32>
    %233 = arith.mulf %27, %232 : vector<8x128xf32>
    %234 = arith.addf %231, %233 : vector<8x128xf32>
    %235 = arith.mulf %57, %228 : vector<8x128xf32>
    %cst_79 = arith.constant 9.99999971E-10 : f32
    %236 = vector.broadcast %cst_79 : f32 to vector<8x128xf32>
    %237 = arith.maximumf %200, %236 : vector<8x128xf32>
    %238 = tpu.reciprocal %237 {approx = true} : vector<8x128xf32> -> vector<8x128xf32>
    %239 = arith.mulf %235, %238 : vector<8x128xf32>
    %cst_80 = arith.constant 1.000000e+00 : f32
    %240 = vector.broadcast %cst_80 : f32 to vector<8x128xf32>
    %241 = arith.addf %240, %239 : vector<8x128xf32>
    %242 = tpu.reciprocal %241 {approx = true} : vector<8x128xf32> -> vector<8x128xf32>
    %243 = arith.mulf %234, %242 : vector<8x128xf32>
    %244 = arith.subf %200, %243 : vector<8x128xf32>
    %cst_81 = arith.constant 0.000000e+00 : f32
    %245 = vector.broadcast %cst_81 : f32 to vector<8x128xf32>
    %246 = arith.maximumf %244, %245 : vector<8x128xf32>
    %247 = arith.mulf %60, %246 : vector<8x128xf32>
    %248 = arith.addf %58, %247 : vector<8x128xf32>
    %cst_82 = arith.constant 0.000000e+00 : f32
    %249 = vector.broadcast %cst_82 : f32 to vector<8x128xf32>
    %250 = arith.maximumf %248, %249 : vector<8x128xf32>
    %251 = math.sqrt %250 : vector<8x128xf32>
    %252 = arith.subf %251, %5 : vector<8x128xf32>
    %253 = arith.mulf %252, %23 : vector<8x128xf32>
    %254 = arith.mulf %246, %7 : vector<8x128xf32>
    %255 = arith.select %38, %253, %254 : vector<8x128xi1>, vector<8x128xf32>
    %256 = arith.mulf %255, %31 : vector<8x128xf32>
    %257 = arith.addf %5, %256 : vector<8x128xf32>
    %cst_83 = arith.constant 9.99999971E-10 : f32
    %258 = vector.broadcast %cst_83 : f32 to vector<8x128xf32>
    %259 = arith.maximumf %246, %258 : vector<8x128xf32>
    %260 = math.log %259 : vector<8x128xf32>
    %cst_84 = arith.constant 1.66666663 : f32
    %261 = vector.broadcast %cst_84 : f32 to vector<8x128xf32>
    %262 = arith.mulf %261, %260 : vector<8x128xf32>
    %cst_85 = arith.constant 9.99999971E-10 : f32
    %263 = vector.broadcast %cst_85 : f32 to vector<8x128xf32>
    %264 = arith.maximumf %257, %263 : vector<8x128xf32>
    %265 = math.log %264 : vector<8x128xf32>
    %cst_86 = arith.constant 0.666666686 : f32
    %266 = vector.broadcast %cst_86 : f32 to vector<8x128xf32>
    %267 = arith.mulf %266, %265 : vector<8x128xf32>
    %268 = arith.subf %262, %267 : vector<8x128xf32>
    %269 = math.exp %268 : vector<8x128xf32>
    %270 = arith.mulf %29, %269 : vector<8x128xf32>
    %cst_87 = arith.constant 9.99999971E-10 : f32
    %271 = vector.broadcast %cst_87 : f32 to vector<8x128xf32>
    %272 = arith.cmpf ogt, %246, %271 : vector<8x128xf32>
    %cst_88 = arith.constant 0.000000e+00 : f32
    %273 = vector.broadcast %cst_88 : f32 to vector<8x128xf32>
    %274 = arith.select %272, %270, %273 : vector<8x128xi1>, vector<8x128xf32>
    %c4_i32 = arith.constant 4 : i32
    %c1_i32_89 = arith.constant 1 : i32
    %275 = tpu.dynamic_rotate %274 by %c1_i32_89 dim 1 : vector<8x128xf32>, i32 -> vector<8x128xf32>
    %276 = arith.select %36, %11, %275 : vector<8x128xi1>, vector<8x128xf32>
    %277 = arith.subf %246, %55 : vector<8x128xf32>
    %278 = arith.subf %274, %276 : vector<8x128xf32>
    %279 = arith.mulf %27, %278 : vector<8x128xf32>
    %280 = arith.addf %277, %279 : vector<8x128xf32>
    %281 = arith.mulf %57, %274 : vector<8x128xf32>
    %cst_90 = arith.constant 9.99999971E-10 : f32
    %282 = vector.broadcast %cst_90 : f32 to vector<8x128xf32>
    %283 = arith.maximumf %246, %282 : vector<8x128xf32>
    %284 = tpu.reciprocal %283 {approx = true} : vector<8x128xf32> -> vector<8x128xf32>
    %285 = arith.mulf %281, %284 : vector<8x128xf32>
    %cst_91 = arith.constant 1.000000e+00 : f32
    %286 = vector.broadcast %cst_91 : f32 to vector<8x128xf32>
    %287 = arith.addf %286, %285 : vector<8x128xf32>
    %288 = tpu.reciprocal %287 {approx = true} : vector<8x128xf32> -> vector<8x128xf32>
    %289 = arith.mulf %280, %288 : vector<8x128xf32>
    %290 = arith.subf %246, %289 : vector<8x128xf32>
    %cst_92 = arith.constant 0.000000e+00 : f32
    %291 = vector.broadcast %cst_92 : f32 to vector<8x128xf32>
    %292 = arith.maximumf %290, %291 : vector<8x128xf32>
    %293 = arith.mulf %60, %292 : vector<8x128xf32>
    %294 = arith.addf %58, %293 : vector<8x128xf32>
    %cst_93 = arith.constant 0.000000e+00 : f32
    %295 = vector.broadcast %cst_93 : f32 to vector<8x128xf32>
    %296 = arith.maximumf %294, %295 : vector<8x128xf32>
    %297 = math.sqrt %296 : vector<8x128xf32>
    %298 = arith.subf %297, %5 : vector<8x128xf32>
    %299 = arith.mulf %298, %23 : vector<8x128xf32>
    %300 = arith.mulf %292, %7 : vector<8x128xf32>
    %301 = arith.select %38, %299, %300 : vector<8x128xi1>, vector<8x128xf32>
    %302 = arith.mulf %301, %31 : vector<8x128xf32>
    %303 = arith.addf %5, %302 : vector<8x128xf32>
    %cst_94 = arith.constant 9.99999971E-10 : f32
    %304 = vector.broadcast %cst_94 : f32 to vector<8x128xf32>
    %305 = arith.maximumf %292, %304 : vector<8x128xf32>
    %306 = math.log %305 : vector<8x128xf32>
    %cst_95 = arith.constant 1.66666663 : f32
    %307 = vector.broadcast %cst_95 : f32 to vector<8x128xf32>
    %308 = arith.mulf %307, %306 : vector<8x128xf32>
    %cst_96 = arith.constant 9.99999971E-10 : f32
    %309 = vector.broadcast %cst_96 : f32 to vector<8x128xf32>
    %310 = arith.maximumf %303, %309 : vector<8x128xf32>
    %311 = math.log %310 : vector<8x128xf32>
    %cst_97 = arith.constant 0.666666686 : f32
    %312 = vector.broadcast %cst_97 : f32 to vector<8x128xf32>
    %313 = arith.mulf %312, %311 : vector<8x128xf32>
    %314 = arith.subf %308, %313 : vector<8x128xf32>
    %315 = math.exp %314 : vector<8x128xf32>
    %316 = arith.mulf %29, %315 : vector<8x128xf32>
    %cst_98 = arith.constant 9.99999971E-10 : f32
    %317 = vector.broadcast %cst_98 : f32 to vector<8x128xf32>
    %318 = arith.cmpf ogt, %292, %317 : vector<8x128xf32>
    %cst_99 = arith.constant 0.000000e+00 : f32
    %319 = vector.broadcast %cst_99 : f32 to vector<8x128xf32>
    %320 = arith.select %318, %316, %319 : vector<8x128xi1>, vector<8x128xf32>
    %c5_i32 = arith.constant 5 : i32
    %c1_i32_100 = arith.constant 1 : i32
    %321 = tpu.dynamic_rotate %320 by %c1_i32_100 dim 1 : vector<8x128xf32>, i32 -> vector<8x128xf32>
    %322 = arith.select %36, %11, %321 : vector<8x128xi1>, vector<8x128xf32>
    %323 = arith.subf %292, %55 : vector<8x128xf32>
    %324 = arith.subf %320, %322 : vector<8x128xf32>
    %325 = arith.mulf %27, %324 : vector<8x128xf32>
    %326 = arith.addf %323, %325 : vector<8x128xf32>
    %327 = arith.mulf %57, %320 : vector<8x128xf32>
    %cst_101 = arith.constant 9.99999971E-10 : f32
    %328 = vector.broadcast %cst_101 : f32 to vector<8x128xf32>
    %329 = arith.maximumf %292, %328 : vector<8x128xf32>
    %330 = tpu.reciprocal %329 {approx = true} : vector<8x128xf32> -> vector<8x128xf32>
    %331 = arith.mulf %327, %330 : vector<8x128xf32>
    %cst_102 = arith.constant 1.000000e+00 : f32
    %332 = vector.broadcast %cst_102 : f32 to vector<8x128xf32>
    %333 = arith.addf %332, %331 : vector<8x128xf32>
    %334 = tpu.reciprocal %333 {approx = true} : vector<8x128xf32> -> vector<8x128xf32>
    %335 = arith.mulf %326, %334 : vector<8x128xf32>
    %336 = arith.subf %292, %335 : vector<8x128xf32>
    %cst_103 = arith.constant 0.000000e+00 : f32
    %337 = vector.broadcast %cst_103 : f32 to vector<8x128xf32>
    %338 = arith.maximumf %336, %337 : vector<8x128xf32>
    %339 = arith.mulf %60, %338 : vector<8x128xf32>
    %340 = arith.addf %58, %339 : vector<8x128xf32>
    %cst_104 = arith.constant 0.000000e+00 : f32
    %341 = vector.broadcast %cst_104 : f32 to vector<8x128xf32>
    %342 = arith.maximumf %340, %341 : vector<8x128xf32>
    %343 = math.sqrt %342 : vector<8x128xf32>
    %344 = arith.subf %343, %5 : vector<8x128xf32>
    %345 = arith.mulf %344, %23 : vector<8x128xf32>
    %346 = arith.mulf %338, %7 : vector<8x128xf32>
    %347 = arith.select %38, %345, %346 : vector<8x128xi1>, vector<8x128xf32>
    %348 = arith.mulf %347, %31 : vector<8x128xf32>
    %349 = arith.addf %5, %348 : vector<8x128xf32>
    %cst_105 = arith.constant 9.99999971E-10 : f32
    %350 = vector.broadcast %cst_105 : f32 to vector<8x128xf32>
    %351 = arith.maximumf %338, %350 : vector<8x128xf32>
    %352 = math.log %351 : vector<8x128xf32>
    %cst_106 = arith.constant 1.66666663 : f32
    %353 = vector.broadcast %cst_106 : f32 to vector<8x128xf32>
    %354 = arith.mulf %353, %352 : vector<8x128xf32>
    %cst_107 = arith.constant 9.99999971E-10 : f32
    %355 = vector.broadcast %cst_107 : f32 to vector<8x128xf32>
    %356 = arith.maximumf %349, %355 : vector<8x128xf32>
    %357 = math.log %356 : vector<8x128xf32>
    %cst_108 = arith.constant 0.666666686 : f32
    %358 = vector.broadcast %cst_108 : f32 to vector<8x128xf32>
    %359 = arith.mulf %358, %357 : vector<8x128xf32>
    %360 = arith.subf %354, %359 : vector<8x128xf32>
    %361 = math.exp %360 : vector<8x128xf32>
    %362 = arith.mulf %29, %361 : vector<8x128xf32>
    %cst_109 = arith.constant 9.99999971E-10 : f32
    %363 = vector.broadcast %cst_109 : f32 to vector<8x128xf32>
    %364 = arith.cmpf ogt, %338, %363 : vector<8x128xf32>
    %cst_110 = arith.constant 0.000000e+00 : f32
    %365 = vector.broadcast %cst_110 : f32 to vector<8x128xf32>
    %366 = arith.select %364, %362, %365 : vector<8x128xi1>, vector<8x128xf32>
    %c6_i32 = arith.constant 6 : i32
    %c1_i32_111 = arith.constant 1 : i32
    %367 = tpu.dynamic_rotate %366 by %c1_i32_111 dim 1 : vector<8x128xf32>, i32 -> vector<8x128xf32>
    %368 = arith.select %36, %11, %367 : vector<8x128xi1>, vector<8x128xf32>
    %369 = arith.subf %338, %55 : vector<8x128xf32>
    %370 = arith.subf %366, %368 : vector<8x128xf32>
    %371 = arith.mulf %27, %370 : vector<8x128xf32>
    %372 = arith.addf %369, %371 : vector<8x128xf32>
    %373 = arith.mulf %57, %366 : vector<8x128xf32>
    %cst_112 = arith.constant 9.99999971E-10 : f32
    %374 = vector.broadcast %cst_112 : f32 to vector<8x128xf32>
    %375 = arith.maximumf %338, %374 : vector<8x128xf32>
    %376 = tpu.reciprocal %375 {approx = true} : vector<8x128xf32> -> vector<8x128xf32>
    %377 = arith.mulf %373, %376 : vector<8x128xf32>
    %cst_113 = arith.constant 1.000000e+00 : f32
    %378 = vector.broadcast %cst_113 : f32 to vector<8x128xf32>
    %379 = arith.addf %378, %377 : vector<8x128xf32>
    %380 = tpu.reciprocal %379 {approx = true} : vector<8x128xf32> -> vector<8x128xf32>
    %381 = arith.mulf %372, %380 : vector<8x128xf32>
    %382 = arith.subf %338, %381 : vector<8x128xf32>
    %cst_114 = arith.constant 0.000000e+00 : f32
    %383 = vector.broadcast %cst_114 : f32 to vector<8x128xf32>
    %384 = arith.maximumf %382, %383 : vector<8x128xf32>
    %385 = arith.mulf %60, %384 : vector<8x128xf32>
    %386 = arith.addf %58, %385 : vector<8x128xf32>
    %cst_115 = arith.constant 0.000000e+00 : f32
    %387 = vector.broadcast %cst_115 : f32 to vector<8x128xf32>
    %388 = arith.maximumf %386, %387 : vector<8x128xf32>
    %389 = math.sqrt %388 : vector<8x128xf32>
    %390 = arith.subf %389, %5 : vector<8x128xf32>
    %391 = arith.mulf %390, %23 : vector<8x128xf32>
    %392 = arith.mulf %384, %7 : vector<8x128xf32>
    %393 = arith.select %38, %391, %392 : vector<8x128xi1>, vector<8x128xf32>
    %394 = arith.mulf %393, %31 : vector<8x128xf32>
    %395 = arith.addf %5, %394 : vector<8x128xf32>
    %cst_116 = arith.constant 9.99999971E-10 : f32
    %396 = vector.broadcast %cst_116 : f32 to vector<8x128xf32>
    %397 = arith.maximumf %384, %396 : vector<8x128xf32>
    %398 = math.log %397 : vector<8x128xf32>
    %cst_117 = arith.constant 1.66666663 : f32
    %399 = vector.broadcast %cst_117 : f32 to vector<8x128xf32>
    %400 = arith.mulf %399, %398 : vector<8x128xf32>
    %cst_118 = arith.constant 9.99999971E-10 : f32
    %401 = vector.broadcast %cst_118 : f32 to vector<8x128xf32>
    %402 = arith.maximumf %395, %401 : vector<8x128xf32>
    %403 = math.log %402 : vector<8x128xf32>
    %cst_119 = arith.constant 0.666666686 : f32
    %404 = vector.broadcast %cst_119 : f32 to vector<8x128xf32>
    %405 = arith.mulf %404, %403 : vector<8x128xf32>
    %406 = arith.subf %400, %405 : vector<8x128xf32>
    %407 = math.exp %406 : vector<8x128xf32>
    %408 = arith.mulf %29, %407 : vector<8x128xf32>
    %cst_120 = arith.constant 9.99999971E-10 : f32
    %409 = vector.broadcast %cst_120 : f32 to vector<8x128xf32>
    %410 = arith.cmpf ogt, %384, %409 : vector<8x128xf32>
    %cst_121 = arith.constant 0.000000e+00 : f32
    %411 = vector.broadcast %cst_121 : f32 to vector<8x128xf32>
    %412 = arith.select %410, %408, %411 : vector<8x128xi1>, vector<8x128xf32>
    %c7_i32 = arith.constant 7 : i32
    %c1_i32_122 = arith.constant 1 : i32
    %413 = tpu.dynamic_rotate %412 by %c1_i32_122 dim 1 : vector<8x128xf32>, i32 -> vector<8x128xf32>
    %414 = arith.select %36, %11, %413 : vector<8x128xi1>, vector<8x128xf32>
    %415 = arith.subf %384, %55 : vector<8x128xf32>
    %416 = arith.subf %412, %414 : vector<8x128xf32>
    %417 = arith.mulf %27, %416 : vector<8x128xf32>
    %418 = arith.addf %415, %417 : vector<8x128xf32>
    %419 = arith.mulf %57, %412 : vector<8x128xf32>
    %cst_123 = arith.constant 9.99999971E-10 : f32
    %420 = vector.broadcast %cst_123 : f32 to vector<8x128xf32>
    %421 = arith.maximumf %384, %420 : vector<8x128xf32>
    %422 = tpu.reciprocal %421 {approx = true} : vector<8x128xf32> -> vector<8x128xf32>
    %423 = arith.mulf %419, %422 : vector<8x128xf32>
    %cst_124 = arith.constant 1.000000e+00 : f32
    %424 = vector.broadcast %cst_124 : f32 to vector<8x128xf32>
    %425 = arith.addf %424, %423 : vector<8x128xf32>
    %426 = tpu.reciprocal %425 {approx = true} : vector<8x128xf32> -> vector<8x128xf32>
    %427 = arith.mulf %418, %426 : vector<8x128xf32>
    %428 = arith.subf %384, %427 : vector<8x128xf32>
    %cst_125 = arith.constant 0.000000e+00 : f32
    %429 = vector.broadcast %cst_125 : f32 to vector<8x128xf32>
    %430 = arith.maximumf %428, %429 : vector<8x128xf32>
    %431 = arith.mulf %60, %430 : vector<8x128xf32>
    %432 = arith.addf %58, %431 : vector<8x128xf32>
    %cst_126 = arith.constant 0.000000e+00 : f32
    %433 = vector.broadcast %cst_126 : f32 to vector<8x128xf32>
    %434 = arith.maximumf %432, %433 : vector<8x128xf32>
    %435 = math.sqrt %434 : vector<8x128xf32>
    %436 = arith.subf %435, %5 : vector<8x128xf32>
    %437 = arith.mulf %436, %23 : vector<8x128xf32>
    %438 = arith.mulf %430, %7 : vector<8x128xf32>
    %439 = arith.select %38, %437, %438 : vector<8x128xi1>, vector<8x128xf32>
    %440 = arith.mulf %439, %31 : vector<8x128xf32>
    %441 = arith.addf %5, %440 : vector<8x128xf32>
    %cst_127 = arith.constant 9.99999971E-10 : f32
    %442 = vector.broadcast %cst_127 : f32 to vector<8x128xf32>
    %443 = arith.maximumf %430, %442 : vector<8x128xf32>
    %444 = math.log %443 : vector<8x128xf32>
    %cst_128 = arith.constant 1.66666663 : f32
    %445 = vector.broadcast %cst_128 : f32 to vector<8x128xf32>
    %446 = arith.mulf %445, %444 : vector<8x128xf32>
    %cst_129 = arith.constant 9.99999971E-10 : f32
    %447 = vector.broadcast %cst_129 : f32 to vector<8x128xf32>
    %448 = arith.maximumf %441, %447 : vector<8x128xf32>
    %449 = math.log %448 : vector<8x128xf32>
    %cst_130 = arith.constant 0.666666686 : f32
    %450 = vector.broadcast %cst_130 : f32 to vector<8x128xf32>
    %451 = arith.mulf %450, %449 : vector<8x128xf32>
    %452 = arith.subf %446, %451 : vector<8x128xf32>
    %453 = math.exp %452 : vector<8x128xf32>
    %454 = arith.mulf %29, %453 : vector<8x128xf32>
    %cst_131 = arith.constant 9.99999971E-10 : f32
    %455 = vector.broadcast %cst_131 : f32 to vector<8x128xf32>
    %456 = arith.cmpf ogt, %430, %455 : vector<8x128xf32>
    %cst_132 = arith.constant 0.000000e+00 : f32
    %457 = vector.broadcast %cst_132 : f32 to vector<8x128xf32>
    %458 = arith.select %456, %454, %457 : vector<8x128xi1>, vector<8x128xf32>
    %459 = arith.mulf %60, %430 : vector<8x128xf32>
    %460 = arith.addf %58, %459 : vector<8x128xf32>
    %cst_133 = arith.constant 0.000000e+00 : f32
    %461 = vector.broadcast %cst_133 : f32 to vector<8x128xf32>
    %462 = arith.maximumf %460, %461 : vector<8x128xf32>
    %463 = math.sqrt %462 : vector<8x128xf32>
    %464 = arith.subf %463, %5 : vector<8x128xf32>
    %465 = arith.mulf %464, %23 : vector<8x128xf32>
    %466 = arith.mulf %430, %7 : vector<8x128xf32>
    %467 = arith.select %38, %465, %466 : vector<8x128xi1>, vector<8x128xf32>
    %c0_134 = arith.constant 0 : index
    %c0_135 = arith.constant 0 : index
    %c0_136 = arith.constant 0 : index
    %468 = vector.load %arg2[%c0_134, %c0_135, %c0_136] : memref<5x8x128xf32, #tpu.memory_space<vmem>>, vector<1x8x128xf32>
    %469 = vector.shape_cast %468 : vector<1x8x128xf32> to vector<8x128xf32>
    %470 = vector.shape_cast %430 : vector<8x128xf32> to vector<1x8x128xf32>
    tpu.vector_store %arg2[%c0_134, %c0_135, %c0_136], %470 {strides = array<i32>} : memref<5x8x128xf32, #tpu.memory_space<vmem>>, vector<1x8x128xf32>,
    %c1_137 = arith.constant 1 : index
    %c0_138 = arith.constant 0 : index
    %c0_139 = arith.constant 0 : index
    %471 = vector.load %arg2[%c1_137, %c0_138, %c0_139] : memref<5x8x128xf32, #tpu.memory_space<vmem>>, vector<1x8x128xf32>
    %472 = vector.shape_cast %471 : vector<1x8x128xf32> to vector<8x128xf32>
    %473 = vector.shape_cast %467 : vector<8x128xf32> to vector<1x8x128xf32>
    tpu.vector_store %arg2[%c1_137, %c0_138, %c0_139], %473 {strides = array<i32>} : memref<5x8x128xf32, #tpu.memory_space<vmem>>, vector<1x8x128xf32>,
    %c2_140 = arith.constant 2 : index
    %c0_141 = arith.constant 0 : index
    %c0_142 = arith.constant 0 : index
    %474 = vector.load %arg2[%c2_140, %c0_141, %c0_142] : memref<5x8x128xf32, #tpu.memory_space<vmem>>, vector<1x8x128xf32>
    %475 = vector.shape_cast %474 : vector<1x8x128xf32> to vector<8x128xf32>
    %476 = vector.shape_cast %458 : vector<8x128xf32> to vector<1x8x128xf32>
    tpu.vector_store %arg2[%c2_140, %c0_141, %c0_142], %476 {strides = array<i32>} : memref<5x8x128xf32, #tpu.memory_space<vmem>>, vector<1x8x128xf32>,
    %c3_143 = arith.constant 3 : index
    %c0_144 = arith.constant 0 : index
    %c0_145 = arith.constant 0 : index
    %477 = vector.load %arg2[%c3_143, %c0_144, %c0_145] : memref<5x8x128xf32, #tpu.memory_space<vmem>>, vector<1x8x128xf32>
    %478 = vector.shape_cast %477 : vector<1x8x128xf32> to vector<8x128xf32>
    %479 = vector.shape_cast %45 : vector<8x128xf32> to vector<1x8x128xf32>
    tpu.vector_store %arg2[%c3_143, %c0_144, %c0_145], %479 {strides = array<i32>} : memref<5x8x128xf32, #tpu.memory_space<vmem>>, vector<1x8x128xf32>,
    %c4_146 = arith.constant 4 : index
    %c0_147 = arith.constant 0 : index
    %c0_148 = arith.constant 0 : index
    %480 = vector.load %arg2[%c4_146, %c0_147, %c0_148] : memref<5x8x128xf32, #tpu.memory_space<vmem>>, vector<1x8x128xf32>
    %481 = vector.shape_cast %480 : vector<1x8x128xf32> to vector<8x128xf32>
    %482 = vector.shape_cast %46 : vector<8x128xf32> to vector<1x8x128xf32>
    tpu.vector_store %arg2[%c4_146, %c0_147, %c0_148], %482 {strides = array<i32>} : memref<5x8x128xf32, #tpu.memory_space<vmem>>, vector<1x8x128xf32>,
    return
  }
  func.func @transform_0(%arg0: i32) -> (i32, i32, i32) {
    %c0_i32 = arith.constant 0 : i32
    %c0_i32_0 = arith.constant 0 : i32
    %c0_i32_1 = arith.constant 0 : i32
    return %c0_i32, %arg0, %c0_i32_0 : i32, i32, i32
  }
  func.func @transform_1(%arg0: i32) -> (i32, i32, i32) {
    %c0_i32 = arith.constant 0 : i32
    %c0_i32_0 = arith.constant 0 : i32
    %c0_i32_1 = arith.constant 0 : i32
    return %c0_i32, %arg0, %c0_i32_0 : i32, i32, i32
  }
}

</mosaic_0001>

<llo_original>
// kernel: tpu_custom_call.1
$region0: #{tpu_custom_call.1}
  #allocation0 [shape = 'u32[]', space=smem, size = 0x4, offset = 0x4, fixed_abs, tag = 'smem constant byte address 0x4 - core index']
  #allocation1 [shape = 'u32[144,128]{1,0:T(1,128)}', space=vmem, size = 0x12000, scoped, tag = 'internal scratch']
  %s0 = inlined_call_operand.hbm [shape: f32[16,8,128], index: 0, kind: input, shape index: {}]
  %s1 = inlined_call_operand.hbm [shape: f32[5,8,128], index: 1, kind: output, shape index: {}]
  %s2 = sld [smem:[#allocation0]]
  $region18: #{tpu_custom_call.1} parent=0
    _
  %s4 = ssub.s32 1, %s2
  %s5 = scalar_select 0, %s4, %s2
  $region1: #{tpu_custom_call.1} parent=0
    #allocation2 [shape = 'u8[65536]{0}', space=vmem, size = 0x10000, scoped, tag = 'input window, operand 0, single buffered']
    #allocation3 [shape = 's32[1]{0}', space=sflag, size = 0x4, scoped, tag = 'scoped memory for tpu_custom_call.1']
    #allocation4 [shape = 's32[1]{0}', space=sflag, size = 0x4, scoped, tag = 'scoped memory for tpu_custom_call.1']
    #allocation5 [shape = 'u8[20480]{0}', space=vmem, size = 0x5000, scoped, tag = 'output window, operand 0, single buffered']
    %6 = vsyncpa [#allocation3], 0
    %7 = vsyncpa [#allocation4], 0
    // Predicated region
    $region2: #{tpu_custom_call.1} parent=1 // pred_check
      _
    $region3: #{tpu_custom_call.1} parent=1 // pred_check_branch
      %9 = sbr.rel (0) target = $region5
    $region4: #{tpu_custom_call.1} parent=1 // pred_region
      %s11 = ssub.s32 2048, 2048
      %12 = vsyncadd [#allocation3], %s11
      %s13 = sshll.u32 [#allocation2], 4
      %s14 = int_to_ptr.vmem [resolvable:$true] %s13
      %19 = dma.hbm_to_vmem [thread:$0]  %s0, 2048, %s14, [#allocation3], 128, 128, 8
    $region5: #{tpu_custom_call.1} parent=1 // pred_fallthru
      _
    // Predicated region
    $region6: #{tpu_custom_call.1} parent=1 // pred_check
      _
    $region7: #{tpu_custom_call.1} parent=1 // pred_check_branch
      %21 = sbr.rel (0) target = $region9
    $region8: #{tpu_custom_call.1} parent=1 // pred_region
      %22 = dma.done [#allocation3], 2048
    $region9: #{tpu_custom_call.1} parent=1 // pred_fallthru
      _
    %v23 = vld [vmem:[#allocation2] sm:$0xff]
    %s24 = scalar_lea.vmem [#allocation2], 8
    %v25 = vld [vmem:[%s24] sm:$0xff]
    %s26 = scalar_lea.vmem [#allocation2], 16
    %v27 = vld [vmem:[%s26] sm:$0xff]
    %s28 = scalar_lea.vmem [#allocation2], 24
    %v29 = vld [vmem:[%s28] sm:$0xff]
    %s30 = scalar_lea.vmem [#allocation2], 32
    %v31 = vld [vmem:[%s30] sm:$0xff]
    %s32 = scalar_lea.vmem [#allocation2], 40
    %v33 = vld [vmem:[%s32] sm:$0xff]
    %s34 = scalar_lea.vmem [#allocation2], 48
    %v35 = vld [vmem:[%s34] sm:$0xff]
    %s36 = scalar_lea.vmem [#allocation2], 56
    %v37 = vld [vmem:[%s36] sm:$0xff]
    %s38 = scalar_lea.vmem [#allocation2], 64
    %v39 = vld [vmem:[%s38] sm:$0xff]
    %s40 = scalar_lea.vmem [#allocation2], 72
    %v41 = vld [vmem:[%s40] sm:$0xff]
    %s42 = scalar_lea.vmem [#allocation2], 80
    %v43 = vld [vmem:[%s42] sm:$0xff]
    %s44 = scalar_lea.vmem [#allocation2], 88
    %v45 = vld [vmem:[%s44] sm:$0xff]
    %s46 = scalar_lea.vmem [#allocation2], 96
    %v47 = vld [vmem:[%s46] sm:$0xff]
    %s48 = scalar_lea.vmem [#allocation2], 104
    %v49 = vld [vmem:[%s48] sm:$0xff]
    %s50 = scalar_lea.vmem [#allocation2], 112
    %v51 = vld [vmem:[%s50] sm:$0xff]
    %s52 = scalar_lea.vmem [#allocation2], 120
    %v53 = vld [vmem:[%s52] sm:$0xff]
    %v54 = vlaneseq
    %v55 = vand.u32 %v54, 127
    %v56 = vand.u32 %v55, 15
    %vm57 = vcmp.eq.s32.totalorder %v56, 0
    %vm58 = vcmp.gt.f32.partialorder %v43, 1e-07
    %v59 = vmul.f32 %v41, %v25
    %v60 = vadd.f32 %v39, %v59
    %v61 = vmul.f32 %v25, %v37
    %v62 = vadd.f32 %v31, %v61
    %v63 = vmin.f32 %v60, %v62
    %v64 = vmax.f32 %v63, 0.0
    %v65 = vmul.f32 %v64, %v35
    %v66 = vmul.f32 %v43, %v25
    %v67 = vadd.f32 %v27, %v66
    %v68 = vsub.f32 %v31, %v64
    %v69 = vmax.f32 %v68, 0.0
    %v70 = vmul.f32 %v69, %v67
    %v71 = vadd.f32 %v70, %v47
    %v72 = vmul.f32 %v35, %v71
    %v73 = vadd.f32 %v23, %v72
    %v74 = vmul.f32 %v49, 1.6666666
    %v75 = vmul.f32 %v27, %v27
    %v76 = vmul.f32 %v43, 2.0
    %v77 = vmax.f32 %v23, 0.0
    %v78 = vmul.f32 %v76, %v77
    %v79 = vadd.f32 %v75, %v78
    %v80 = vmax.f32 %v79, 0.0
    %v81 = vrsqrt.pop %v80
    %v82 = vmul.f32 %v80, %v81
    %vm83 = vcmp.eq.f32.partialorder %v80, inf
    %v84 = vsel %vm83, %v80, %v82
    %vm85 = vcmp.eq.f32.partialorder %v80, 0.0
    %v86 = vand.u32 %v80, 2147483648
    %v87 = vsel %vm85, %v86, %v84
    %v88 = vsub.f32 %v87, %v27
    %v89 = vmul.f32 %v88, %v45
    %v90 = vmul.f32 %v77, %v29
    %v91 = vsel %vm58, %v89, %v90
    %v92 = vmul.f32 %v91, %v53
    %v93 = vadd.f32 %v27, %v92
    %v94 = vmax.f32 %v77, 1e-09
    %v95 = vlog2.pop %v94
    %v96 = vmul.f32 %v95, 0.6931472
    %v97 = vmul.f32 %v96, 1.6666666
    %v98 = vmax.f32 %v93, 1e-09
    %v99 = vlog2.pop %v98
    %v100 = vmul.f32 %v99, 0.6931472
    %v101 = vmul.f32 %v100, 0.6666667
    %v102 = vsub.f32 %v97, %v101
    %v103 = vmul.f32 %v102, 1.442695
    %v104 = vpow.pop %v103
    %v105 = vmul.f32 %v51, %v104
    %vm106 = vcmp.gt.f32.partialorder %v77, 1e-09
    %v107 = vsel %vm106, %v105, 0.0
    %108 = vrot.lane.b32.xlu0 %v107, 1
    %v109 = vpop.permute.xlu0 %108
    %v110 = vsel %vm57, %v33, %v109
    %v111 = vsub.f32 %v77, %v73
    %v112 = vsub.f32 %v107, %v110
    %v113 = vmul.f32 %v49, %v112
    %v114 = vadd.f32 %v111, %v113
    %v115 = vmul.f32 %v74, %v107
    %v116 = vrcp.pop %v94
    %v117 = vmul.f32 %v115, %v116
    %v118 = vadd.f32 %v117, 1.0
    %v119 = vrcp.pop %v118
    %v120 = vmul.f32 %v114, %v119
    %v121 = vsub.f32 %v77, %v120
    %v122 = vmax.f32 %v121, 0.0
    %v123 = vmul.f32 %v76, %v122
    %v124 = vadd.f32 %v75, %v123
    %v125 = vmax.f32 %v124, 0.0
    %v126 = vrsqrt.pop %v125
    %v127 = vmul.f32 %v125, %v126
    %vm128 = vcmp.eq.f32.partialorder %v125, inf
    %v129 = vsel %vm128, %v125, %v127
    %vm130 = vcmp.eq.f32.partialorder %v125, 0.0
    %v131 = vand.u32 %v125, 2147483648
    %v132 = vsel %vm130, %v131, %v129
    %v133 = vsub.f32 %v132, %v27
    %v134 = vmul.f32 %v133, %v45
    %v135 = vmul.f32 %v122, %v29
    %v136 = vsel %vm58, %v134, %v135
    %v137 = vmul.f32 %v136, %v53
    %v138 = vadd.f32 %v27, %v137
    %v139 = vmax.f32 %v122, 1e-09
    %v140 = vlog2.pop %v139
    %v141 = vmul.f32 %v140, 0.6931472
    %v142 = vmul.f32 %v141, 1.6666666
    %v143 = vmax.f32 %v138, 1e-09
    %v144 = vlog2.pop %v143
    %v145 = vmul.f32 %v144, 0.6931472
    %v146 = vmul.f32 %v145, 0.6666667
    %v147 = vsub.f32 %v142, %v146
    %v148 = vmul.f32 %v147, 1.442695
    %v149 = vpow.pop %v148
    %v150 = vmul.f32 %v51, %v149
    %vm151 = vcmp.gt.f32.partialorder %v122, 1e-09
    %v152 = vsel %vm151, %v150, 0.0
    %153 = vrot.lane.b32.xlu0 %v152, 1
    %v154 = vpop.permute.xlu0 %153
    %v155 = vsel %vm57, %v33, %v154
    %v156 = vsub.f32 %v122, %v73
    %v157 = vsub.f32 %v152, %v155
    %v158 = vmul.f32 %v49, %v157
    %v159 = vadd.f32 %v156, %v158
    %v160 = vmul.f32 %v74, %v152
    %v161 = vrcp.pop %v139
    %v162 = vmul.f32 %v160, %v161
    %v163 = vadd.f32 %v162, 1.0
    %v164 = vrcp.pop %v163
    %v165 = vmul.f32 %v159, %v164
    %v166 = vsub.f32 %v122, %v165
    %v167 = vmax.f32 %v166, 0.0
    %v168 = vmul.f32 %v76, %v167
    %v169 = vadd.f32 %v75, %v168
    %v170 = vmax.f32 %v169, 0.0
    %v171 = vrsqrt.pop %v170
    %v172 = vmul.f32 %v170, %v171
    %vm173 = vcmp.eq.f32.partialorder %v170, inf
    %v174 = vsel %vm173, %v170, %v172
    %vm175 = vcmp.eq.f32.partialorder %v170, 0.0
    %v176 = vand.u32 %v170, 2147483648
    %v177 = vsel %vm175, %v176, %v174
    %v178 = vsub.f32 %v177, %v27
    %v179 = vmul.f32 %v178, %v45
    %v180 = vmul.f32 %v167, %v29
    %v181 = vsel %vm58, %v179, %v180
    %v182 = vmul.f32 %v181, %v53
    %v183 = vadd.f32 %v27, %v182
    %v184 = vmax.f32 %v167, 1e-09
    %v185 = vlog2.pop %v184
    %v186 = vmul.f32 %v185, 0.6931472
    %v187 = vmul.f32 %v186, 1.6666666
    %v188 = vmax.f32 %v183, 1e-09
    %v189 = vlog2.pop %v188
    %v190 = vmul.f32 %v189, 0.6931472
    %v191 = vmul.f32 %v190, 0.6666667
    %v192 = vsub.f32 %v187, %v191
    %v193 = vmul.f32 %v192, 1.442695
    %v194 = vpow.pop %v193
    %v195 = vmul.f32 %v51, %v194
    %vm196 = vcmp.gt.f32.partialorder %v167, 1e-09
    %v197 = vsel %vm196, %v195, 0.0
    %198 = vrot.lane.b32.xlu0 %v197, 1
    %v199 = vpop.permute.xlu0 %198
    %v200 = vsel %vm57, %v33, %v199
    %v201 = vsub.f32 %v167, %v73
    %v202 = vsub.f32 %v197, %v200
    %v203 = vmul.f32 %v49, %v202
    %v204 = vadd.f32 %v201, %v203
    %v205 = vmul.f32 %v74, %v197
    %v206 = vrcp.pop %v184
    %v207 = vmul.f32 %v205, %v206
    %v208 = vadd.f32 %v207, 1.0
    %v209 = vrcp.pop %v208
    %v210 = vmul.f32 %v204, %v209
    %v211 = vsub.f32 %v167, %v210
    %v212 = vmax.f32 %v211, 0.0
    %v213 = vmul.f32 %v76, %v212
    %v214 = vadd.f32 %v75, %v213
    %v215 = vmax.f32 %v214, 0.0
    %v216 = vrsqrt.pop %v215
    %v217 = vmul.f32 %v215, %v216
    %vm218 = vcmp.eq.f32.partialorder %v215, inf
    %v219 = vsel %vm218, %v215, %v217
    %vm220 = vcmp.eq.f32.partialorder %v215, 0.0
    %v221 = vand.u32 %v215, 2147483648
    %v222 = vsel %vm220, %v221, %v219
    %v223 = vsub.f32 %v222, %v27
    %v224 = vmul.f32 %v223, %v45
    %v225 = vmul.f32 %v212, %v29
    %v226 = vsel %vm58, %v224, %v225
    %v227 = vmul.f32 %v226, %v53
    %v228 = vadd.f32 %v27, %v227
    %v229 = vmax.f32 %v212, 1e-09
    %v230 = vlog2.pop %v229
    %v231 = vmul.f32 %v230, 0.6931472
    %v232 = vmul.f32 %v231, 1.6666666
    %v233 = vmax.f32 %v228, 1e-09
    %v234 = vlog2.pop %v233
    %v235 = vmul.f32 %v234, 0.6931472
    %v236 = vmul.f32 %v235, 0.6666667
    %v237 = vsub.f32 %v232, %v236
    %v238 = vmul.f32 %v237, 1.442695
    %v239 = vpow.pop %v238
    %v240 = vmul.f32 %v51, %v239
    %vm241 = vcmp.gt.f32.partialorder %v212, 1e-09
    %v242 = vsel %vm241, %v240, 0.0
    %243 = vrot.lane.b32.xlu0 %v242, 1
    %v244 = vpop.permute.xlu0 %243
    %v245 = vsel %vm57, %v33, %v244
    %v246 = vsub.f32 %v212, %v73
    %v247 = vsub.f32 %v242, %v245
    %v248 = vmul.f32 %v49, %v247
    %v249 = vadd.f32 %v246, %v248
    %v250 = vmul.f32 %v74, %v242
    %v251 = vrcp.pop %v229
    %v252 = vmul.f32 %v250, %v251
    %v253 = vadd.f32 %v252, 1.0
    %v254 = vrcp.pop %v253
    %v255 = vmul.f32 %v249, %v254
    %v256 = vsub.f32 %v212, %v255
    %v257 = vmax.f32 %v256, 0.0
    %v258 = vmul.f32 %v76, %v257
    %v259 = vadd.f32 %v75, %v258
    %v260 = vmax.f32 %v259, 0.0
    %v261 = vrsqrt.pop %v260
    %v262 = vmul.f32 %v260, %v261
    %vm263 = vcmp.eq.f32.partialorder %v260, inf
    %v264 = vsel %vm263, %v260, %v262
    %vm265 = vcmp.eq.f32.partialorder %v260, 0.0
    %v266 = vand.u32 %v260, 2147483648
    %v267 = vsel %vm265, %v266, %v264
    %v268 = vsub.f32 %v267, %v27
    %v269 = vmul.f32 %v268, %v45
    %v270 = vmul.f32 %v257, %v29
    %v271 = vsel %vm58, %v269, %v270
    %v272 = vmul.f32 %v271, %v53
    %v273 = vadd.f32 %v27, %v272
    %v274 = vmax.f32 %v257, 1e-09
    %v275 = vlog2.pop %v274
    %v276 = vmul.f32 %v275, 0.6931472
    %v277 = vmul.f32 %v276, 1.6666666
    %v278 = vmax.f32 %v273, 1e-09
    %v279 = vlog2.pop %v278
    %v280 = vmul.f32 %v279, 0.6931472
    %v281 = vmul.f32 %v280, 0.6666667
    %v282 = vsub.f32 %v277, %v281
    %v283 = vmul.f32 %v282, 1.442695
    %v284 = vpow.pop %v283
    %v285 = vmul.f32 %v51, %v284
    %vm286 = vcmp.gt.f32.partialorder %v257, 1e-09
    %v287 = vsel %vm286, %v285, 0.0
    %288 = vrot.lane.b32.xlu0 %v287, 1
    %v289 = vpop.permute.xlu0 %288
    %v290 = vsel %vm57, %v33, %v289
    %v291 = vsub.f32 %v257, %v73
    %v292 = vsub.f32 %v287, %v290
    %v293 = vmul.f32 %v49, %v292
    %v294 = vadd.f32 %v291, %v293
    %v295 = vmul.f32 %v74, %v287
    %v296 = vrcp.pop %v274
    %v297 = vmul.f32 %v295, %v296
    %v298 = vadd.f32 %v297, 1.0
    %v299 = vrcp.pop %v298
    %v300 = vmul.f32 %v294, %v299
    %v301 = vsub.f32 %v257, %v300
    %v302 = vmax.f32 %v301, 0.0
    %v303 = vmul.f32 %v76, %v302
    %v304 = vadd.f32 %v75, %v303
    %v305 = vmax.f32 %v304, 0.0
    %v306 = vrsqrt.pop %v305
    %v307 = vmul.f32 %v305, %v306
    %vm308 = vcmp.eq.f32.partialorder %v305, inf
    %v309 = vsel %vm308, %v305, %v307
    %vm310 = vcmp.eq.f32.partialorder %v305, 0.0
    %v311 = vand.u32 %v305, 2147483648
    %v312 = vsel %vm310, %v311, %v309
    %v313 = vsub.f32 %v312, %v27
    %v314 = vmul.f32 %v313, %v45
    %v315 = vmul.f32 %v302, %v29
    %v316 = vsel %vm58, %v314, %v315
    %v317 = vmul.f32 %v316, %v53
    %v318 = vadd.f32 %v27, %v317
    %v319 = vmax.f32 %v302, 1e-09
    %v320 = vlog2.pop %v319
    %v321 = vmul.f32 %v320, 0.6931472
    %v322 = vmul.f32 %v321, 1.6666666
    %v323 = vmax.f32 %v318, 1e-09
    %v324 = vlog2.pop %v323
    %v325 = vmul.f32 %v324, 0.6931472
    %v326 = vmul.f32 %v325, 0.6666667
    %v327 = vsub.f32 %v322, %v326
    %v328 = vmul.f32 %v327, 1.442695
    %v329 = vpow.pop %v328
    %v330 = vmul.f32 %v51, %v329
    %vm331 = vcmp.gt.f32.partialorder %v302, 1e-09
    %v332 = vsel %vm331, %v330, 0.0
    %333 = vrot.lane.b32.xlu0 %v332, 1
    %v334 = vpop.permute.xlu0 %333
    %v335 = vsel %vm57, %v33, %v334
    %v336 = vsub.f32 %v302, %v73
    %v337 = vsub.f32 %v332, %v335
    %v338 = vmul.f32 %v49, %v337
    %v339 = vadd.f32 %v336, %v338
    %v340 = vmul.f32 %v74, %v332
    %v341 = vrcp.pop %v319
    %v342 = vmul.f32 %v340, %v341
    %v343 = vadd.f32 %v342, 1.0
    %v344 = vrcp.pop %v343
    %v345 = vmul.f32 %v339, %v344
    %v346 = vsub.f32 %v302, %v345
    %v347 = vmax.f32 %v346, 0.0
    %v348 = vmul.f32 %v76, %v347
    %v349 = vadd.f32 %v75, %v348
    %v350 = vmax.f32 %v349, 0.0
    %v351 = vrsqrt.pop %v350
    %v352 = vmul.f32 %v350, %v351
    %vm353 = vcmp.eq.f32.partialorder %v350, inf
    %v354 = vsel %vm353, %v350, %v352
    %vm355 = vcmp.eq.f32.partialorder %v350, 0.0
    %v356 = vand.u32 %v350, 2147483648
    %v357 = vsel %vm355, %v356, %v354
    %v358 = vsub.f32 %v357, %v27
    %v359 = vmul.f32 %v358, %v45
    %v360 = vmul.f32 %v347, %v29
    %v361 = vsel %vm58, %v359, %v360
    %v362 = vmul.f32 %v361, %v53
    %v363 = vadd.f32 %v27, %v362
    %v364 = vmax.f32 %v347, 1e-09
    %v365 = vlog2.pop %v364
    %v366 = vmul.f32 %v365, 0.6931472
    %v367 = vmul.f32 %v366, 1.6666666
    %v368 = vmax.f32 %v363, 1e-09
    %v369 = vlog2.pop %v368
    %v370 = vmul.f32 %v369, 0.6931472
    %v371 = vmul.f32 %v370, 0.6666667
    %v372 = vsub.f32 %v367, %v371
    %v373 = vmul.f32 %v372, 1.442695
    %v374 = vpow.pop %v373
    %v375 = vmul.f32 %v51, %v374
    %vm376 = vcmp.gt.f32.partialorder %v347, 1e-09
    %v377 = vsel %vm376, %v375, 0.0
    %378 = vrot.lane.b32.xlu0 %v377, 1
    %v379 = vpop.permute.xlu0 %378
    %v380 = vsel %vm57, %v33, %v379
    %v381 = vsub.f32 %v347, %v73
    %v382 = vsub.f32 %v377, %v380
    %v383 = vmul.f32 %v49, %v382
    %v384 = vadd.f32 %v381, %v383
    %v385 = vmul.f32 %v74, %v377
    %v386 = vrcp.pop %v364
    %v387 = vmul.f32 %v385, %v386
    %v388 = vadd.f32 %v387, 1.0
    %v389 = vrcp.pop %v388
    %v390 = vmul.f32 %v384, %v389
    %v391 = vsub.f32 %v347, %v390
    %v392 = vmax.f32 %v391, 0.0
    %v393 = vmul.f32 %v76, %v392
    %v394 = vadd.f32 %v75, %v393
    %v395 = vmax.f32 %v394, 0.0
    %v396 = vrsqrt.pop %v395
    %v397 = vmul.f32 %v395, %v396
    %vm398 = vcmp.eq.f32.partialorder %v395, inf
    %v399 = vsel %vm398, %v395, %v397
    %vm400 = vcmp.eq.f32.partialorder %v395, 0.0
    %v401 = vand.u32 %v395, 2147483648
    %v402 = vsel %vm400, %v401, %v399
    %v403 = vsub.f32 %v402, %v27
    %v404 = vmul.f32 %v403, %v45
    %v405 = vmul.f32 %v392, %v29
    %v406 = vsel %vm58, %v404, %v405
    %v407 = vmul.f32 %v406, %v53
    %v408 = vadd.f32 %v27, %v407
    %v409 = vmax.f32 %v392, 1e-09
    %v410 = vlog2.pop %v409
    %v411 = vmul.f32 %v410, 0.6931472
    %v412 = vmul.f32 %v411, 1.6666666
    %v413 = vmax.f32 %v408, 1e-09
    %v414 = vlog2.pop %v413
    %v415 = vmul.f32 %v414, 0.6931472
    %v416 = vmul.f32 %v415, 0.6666667
    %v417 = vsub.f32 %v412, %v416
    %v418 = vmul.f32 %v417, 1.442695
    %v419 = vpow.pop %v418
    %v420 = vmul.f32 %v51, %v419
    %vm421 = vcmp.gt.f32.partialorder %v392, 1e-09
    %v422 = vsel %vm421, %v420, 0.0
    %423 = vrot.lane.b32.xlu0 %v422, 1
    %v424 = vpop.permute.xlu0 %423
    %v425 = vsel %vm57, %v33, %v424
    %v426 = vsub.f32 %v392, %v73
    %v427 = vsub.f32 %v422, %v425
    %v428 = vmul.f32 %v49, %v427
    %v429 = vadd.f32 %v426, %v428
    %v430 = vmul.f32 %v74, %v422
    %v431 = vrcp.pop %v409
    %v432 = vmul.f32 %v430, %v431
    %v433 = vadd.f32 %v432, 1.0
    %v434 = vrcp.pop %v433
    %v435 = vmul.f32 %v429, %v434
    %v436 = vsub.f32 %v392, %v435
    %v437 = vmax.f32 %v436, 0.0
    %v438 = vmul.f32 %v76, %v437
    %v439 = vadd.f32 %v75, %v438
    %v440 = vmax.f32 %v439, 0.0
    %v441 = vrsqrt.pop %v440
    %v442 = vmul.f32 %v440, %v441
    %vm443 = vcmp.eq.f32.partialorder %v440, inf
    %v444 = vsel %vm443, %v440, %v442
    %vm445 = vcmp.eq.f32.partialorder %v440, 0.0
    %v446 = vand.u32 %v440, 2147483648
    %v447 = vsel %vm445, %v446, %v444
    %v448 = vsub.f32 %v447, %v27
    %v449 = vmul.f32 %v448, %v45
    %v450 = vmul.f32 %v437, %v29
    %v451 = vsel %vm58, %v449, %v450
    %v452 = vmul.f32 %v451, %v53
    %v453 = vadd.f32 %v27, %v452
    %v454 = vmax.f32 %v437, 1e-09
    %v455 = vlog2.pop %v454
    %v456 = vmul.f32 %v455, 0.6931472
    %v457 = vmul.f32 %v456, 1.6666666
    %v458 = vmax.f32 %v453, 1e-09
    %v459 = vlog2.pop %v458
    %v460 = vmul.f32 %v459, 0.6931472
    %v461 = vmul.f32 %v460, 0.6666667
    %v462 = vsub.f32 %v457, %v461
    %v463 = vmul.f32 %v462, 1.442695
    %v464 = vpow.pop %v463
    %v465 = vmul.f32 %v51, %v464
    %vm466 = vcmp.gt.f32.partialorder %v437, 1e-09
    %v467 = vsel %vm466, %v465, 0.0
    %468 = vst [vmem:[#allocation5] sm:$0xff] %v437
    %s469 = scalar_lea.vmem [#allocation5], 8
    %470 = vst [vmem:[%s469] sm:$0xff] %v451
    %s471 = scalar_lea.vmem [#allocation5], 16
    %472 = vst [vmem:[%s471] sm:$0xff] %v467
    %s473 = scalar_lea.vmem [#allocation5], 24
    %474 = vst [vmem:[%s473] sm:$0xff] %v64
    %s475 = scalar_lea.vmem [#allocation5], 32
    %476 = vst [vmem:[%s475] sm:$0xff] %v65
    // Predicated region
    $region10: #{tpu_custom_call.1} parent=1 // pred_check
      _
    $region11: #{tpu_custom_call.1} parent=1 // pred_check_branch
      %478 = sbr.rel (0) target = $region13
    $region12: #{tpu_custom_call.1} parent=1 // pred_region
      %s480 = ssub.s32 640, 640
      %481 = vsyncadd [#allocation4], %s480
      %s482 = sshll.u32 [#allocation5], 4
      %s483 = int_to_ptr.vmem [resolvable:$true] %s482
      %488 = dma.vmem_to_hbm [thread:$0]  %s483, 640, %s1, [#allocation4], 128, 128, 8
    $region13: #{tpu_custom_call.1} parent=1 // pred_fallthru
      _
    // Predicated region
    $region14: #{tpu_custom_call.1} parent=1 // pred_check
      _
    $region15: #{tpu_custom_call.1} parent=1 // pred_check_branch
      %490 = sbr.rel (0) target = $region17
    $region16: #{tpu_custom_call.1} parent=1 // pred_region
      %491 = dma.done [#allocation4], 640
    $region17: #{tpu_custom_call.1} parent=1 // pred_fallthru
      _
    %492 = vsyncpa [#allocation3], 1
    %493 = vsyncpa [#allocation4], 1

</llo_original>
